<compile_context>
chip_gen: v7x
topology: tpu7x:2x2x1
jax: 0.10.0
libtpu: 0.0.40
codegen_flags: <defaults>
</compile_context>

<pallas_src>
import jax
import jax.numpy as jnp
from jax.experimental import pallas as pl
from jax.experimental.pallas import tpu as pltpu


def _deconv_bn_silu_kernel(x_ref, w_ref, shift_ref, o_ref):
    # x_ref:     (tm, C1)      bf16 input pixels (one row per spatial location)
    # w_ref:     (C1, colsp)   bf16 weight with BN scale pre-folded, lane-padded
    # shift_ref: (1,  colsp)   f32 BN shift per output column
    # o_ref:     (tm, colsp)
    y = jnp.dot(x_ref[...], w_ref[...], preferred_element_type=jnp.float32)
    y = y + shift_ref[...]
    # SiLU: y * sigmoid(y).  The reciprocal goes to the EUP (approx) so the
    # store-heavy epilogue does not load the VALU with a divide sequence.
    sig = pl.reciprocal(1.0 + jnp.exp(-y), approx=True)
    o_ref[...] = (y * sig).astype(o_ref.dtype)


def _round_up(x, m):
    return ((x + m - 1) // m) * m


def _pick_tm(M, C1, colsp, in_bytes, out_bytes, tm_max=1024,
             vmem_budget=24 * 1024 * 1024):
    """Largest row tile (multiple of 8) that
       (a) fits a conservative VMEM budget (double-buffered x/out tiles plus
           resident weight & shift) -- safe for v7x's 64 MiB VMEM,
       (b) keeps >= 2 grid steps so both v7x TensorCores get work,
       (c) does not exceed tm_max."""
    resident = C1 * colsp * in_bytes + colsp * 4
    per_row = 2 * (C1 * in_bytes + colsp * out_bytes)      # double-buffered
    tm_fit = max(8, (vmem_budget - resident) // per_row)
    tm_two_steps = _round_up(pl.cdiv(M, 2), 8)             # >= 2 grid steps
    tm = min(tm_max, tm_fit, tm_two_steps)
    return int(max(8, (tm // 8) * 8))


def conv_transpose_bn_silu(x, weight, gamma, beta, running_mean, running_var,
                           k=2, s=2, eps=1e-5, tm=None,
                           compute_dtype=jnp.bfloat16, out_dtype=None):
    """Fused act(bn(conv_transpose(x))) for k == s, p == 0 (module defaults).

    x: (N, C1, H, W) NCHW.  weight: (C1, C2, k, k) (PyTorch ConvTranspose2d).
    Returns (N, C2, H*k, W*k) NCHW.  Set out_dtype=jnp.bfloat16 to halve the
    output writeback if the consumer accepts it."""
    assert k == s, "fast path requires kernel == stride (module defaults)"
    N, C1, H, W = x.shape
    C1w, C2, kh, kw = weight.shape
    assert C1w == C1 and kh == k and kw == k
    if out_dtype is None:
        out_dtype = x.dtype

    M = N * H * W
    cols = C2 * k * k
    colsp = _round_up(cols, 128)       # lane-dense output (unmasked stores)

    # ---- one-time layout / parameter prep in plain JAX ----
    # TODO(synk): the NCHW<->matmul permutes are layout glue required by the
    # PyTorch NCHW contract; in an NHWC pipeline (or if the consumer accepts
    # (N, H, W, C2, k, k)) both permutes disappear.
    x2d = jnp.transpose(x, (0, 2, 3, 1)).reshape(M, C1).astype(compute_dtype)

    scale_c = gamma / jnp.sqrt(running_var + eps)            # (C2,)
    shift_c = beta - running_mean * scale_c                  # (C2,)
    # Fold BN scale into the weight -> only the shift survives in-kernel.
    w2d = weight.reshape(C1, cols) * jnp.repeat(scale_c, k * k)[None, :]
    w2d = jnp.pad(w2d, ((0, 0), (0, colsp - cols))).astype(compute_dtype)
    shift = jnp.pad(jnp.repeat(shift_c, k * k), (0, colsp - cols))
    shift = shift.reshape(1, colsp).astype(jnp.float32)

    in_bytes = jnp.dtype(compute_dtype).itemsize
    out_bytes = jnp.dtype(out_dtype).itemsize
    if tm is None:
        tm = _pick_tm(M, C1, colsp, in_bytes, out_bytes)
    tm = int(max(8, (min(tm, _round_up(M, 8)) // 8) * 8))

    Mp = _round_up(M, tm)
    if Mp != M:
        x2d = jnp.pad(x2d, ((0, Mp - M), (0, 0)))

    out2d = pl.pallas_call(
        _deconv_bn_silu_kernel,
        out_shape=jax.ShapeDtypeStruct((Mp, colsp), out_dtype),
        grid_spec=pltpu.PrefetchScalarGridSpec(
            num_scalar_prefetch=0,
            grid=(Mp // tm,),
            in_specs=[
                pl.BlockSpec((tm, C1), lambda i: (i, 0)),
                pl.BlockSpec((C1, colsp), lambda i: (0, 0)),
                pl.BlockSpec((1, colsp), lambda i: (0, 0)),
            ],
            out_specs=pl.BlockSpec((tm, colsp), lambda i: (i, 0)),
        ),
        compiler_params=pltpu.CompilerParams(
            dimension_semantics=("parallel",)),
    )(x2d, w2d, shift)

    # (M, C2*k*k) -> (N, H, W, C2, k, k) -> (N, C2, H*k, W*k)
    out = out2d[:M, :cols].reshape(N, H, W, C2, k, k)
    out = jnp.transpose(out, (0, 3, 1, 4, 2, 5)).reshape(N, C2, H * k, W * k)
    return out


def _reference(x, weight, gamma, beta, running_mean, running_var,
               k=2, s=2, eps=1e-5):
    """Pure-JAX reference with PyTorch ConvTranspose2d semantics:
    out[n, co, ih*s+kh, iw*s+kw] += x[n, ci, ih, iw] * weight[ci, co, kh, kw],
    expressed as a dilated correlation with a flipped, channel-transposed
    kernel (independent of the Pallas lowering)."""
    w = jnp.transpose(jnp.flip(weight, axis=(2, 3)), (1, 0, 2, 3))  # (C2,C1,k,k)
    y = jax.lax.conv_general_dilated(
        x, w, window_strides=(1, 1),
        padding=[(k - 1, k - 1), (k - 1, k - 1)],
        lhs_dilation=(s, s),
        dimension_numbers=("NCHW", "OIHW", "NCHW"))
    scale = gamma / jnp.sqrt(running_var + eps)
    shift = beta - running_mean * scale
    y = y * scale[None, :, None, None] + shift[None, :, None, None]
    return y * jax.nn.sigmoid(y)


def _run_case(key, N, C1, C2, H, W, K):
    k_x, k_w, k_g, k_b, k_m, k_v = jax.random.split(key, 6)
    x = jax.random.normal(k_x, (N, C1, H, W), dtype=jnp.float32)
    # PyTorch ConvTranspose2d weight shape: (in_channels, out_channels, kH, kW)
    weight = jax.random.normal(k_w, (C1, C2, K, K), dtype=jnp.float32) * 0.1
    gamma = jax.random.normal(k_g, (C2,), dtype=jnp.float32) * 0.1 + 1.0
    beta = jax.random.normal(k_b, (C2,), dtype=jnp.float32) * 0.1
    running_mean = jax.random.normal(k_m, (C2,), dtype=jnp.float32) * 0.1
    running_var = jax.random.uniform(k_v, (C2,), dtype=jnp.float32,
                                     minval=0.5, maxval=1.5)

    out = conv_transpose_bn_silu(x, weight, gamma, beta,
                                 running_mean, running_var, k=K, s=K)
    out = jax.block_until_ready(out)

    ref = _reference(x, weight, gamma, beta, running_mean, running_var, k=K, s=K)
    assert out.shape == (N, C2, H * K, W * K), out.shape
    err = float(jnp.max(jnp.abs(out.astype(jnp.float32) - ref)))
    # bf16 inputs + approx reciprocal -> loosened tolerance vs. f32 reference.
    assert jnp.allclose(out.astype(jnp.float32), ref, atol=3e-2, rtol=3e-2), err


if __name__ == "__main__":
    key = jax.random.PRNGKey(0)
    k1, k2 = jax.random.split(key)
    # Small lane-padded case (cols = 32 -> padded to 128).
    _run_case(k1, N=2, C1=4, C2=8, H=16, W=16, K=2)
    # Already lane-aligned case (cols = 128, no padding path).
    _run_case(k2, N=1, C1=16, C2=32, H=8, W=8, K=2)
    print("KERNEL_OK")
</pallas_src>

<mosaic_0001>
module attributes {stable_mosaic.version = 11 : i64} {
  func.func @_deconv_bn_silu_kernel(%arg0: i32, %arg1: memref<256x4xbf16, #tpu.memory_space<vmem>>, %arg2: memref<4x128xbf16, #tpu.memory_space<vmem>>, %arg3: memref<1x128xf32, #tpu.memory_space<vmem>>, %arg4: memref<256x128xf32, #tpu.memory_space<vmem>>) attributes {dimension_semantics = [#tpu.dimension_semantics<parallel>], iteration_bounds = array<i64: 2>, scalar_prefetch = 0 : i64, scratch_operands = 0 : i64, tpu.core_type = #tpu.core_type<tc>, window_params = [{transform_indices = @transform_0, window_bounds = array<i64: 256, 4>}, {pipeline_mode = #tpu.pipeline_mode<synchronous>, transform_indices = @transform_1, window_bounds = array<i64: 4, 128>}, {pipeline_mode = #tpu.pipeline_mode<synchronous>, transform_indices = @transform_2, window_bounds = array<i64: 1, 128>}, {transform_indices = @transform_3, window_bounds = array<i64: 256, 128>}]} {
    %c0 = arith.constant 0 : index
    %c0_0 = arith.constant 0 : index
    %0 = vector.load %arg1[%c0, %c0_0] : memref<256x4xbf16, #tpu.memory_space<vmem>>, vector<256x4xbf16>
    %c0_1 = arith.constant 0 : index
    %c0_2 = arith.constant 0 : index
    %1 = vector.load %arg2[%c0_1, %c0_2] : memref<4x128xbf16, #tpu.memory_space<vmem>>, vector<4x128xbf16>
    %cst = arith.constant dense<0.000000e+00> : vector<256x128xf32>
    %2 = tpu.matmul %0, %1, %cst {dimension_numbers = #tpu.dot_dimension_numbers<[1], [0], [0], [1], [0, 0, 1, 1], [], []>} : vector<256x4xbf16>, vector<4x128xbf16>, vector<256x128xf32> -> vector<256x128xf32>
    %c0_3 = arith.constant 0 : index
    %c0_4 = arith.constant 0 : index
    %3 = vector.load %arg3[%c0_3, %c0_4] : memref<1x128xf32, #tpu.memory_space<vmem>>, vector<1x128xf32>
    %4 = vector.broadcast %3 : vector<1x128xf32> to vector<256x128xf32>
    %5 = arith.addf %2, %4 : vector<256x128xf32>
    %cst_5 = arith.constant 0.000000e+00 : f32
    %6 = vector.broadcast %cst_5 : f32 to vector<256x128xf32>
    %7 = arith.subf %6, %5 : vector<256x128xf32>
    %8 = math.exp %7 : vector<256x128xf32>
    %cst_6 = arith.constant 1.000000e+00 : f32
    %9 = vector.broadcast %cst_6 : f32 to vector<256x128xf32>
    %10 = arith.addf %9, %8 : vector<256x128xf32>
    %11 = tpu.reciprocal %10 {approx = true} : vector<256x128xf32> -> vector<256x128xf32>
    %12 = arith.mulf %5, %11 : vector<256x128xf32>
    %c0_7 = arith.constant 0 : index
    %c0_8 = arith.constant 0 : index
    %13 = vector.load %arg4[%c0_7, %c0_8] : memref<256x128xf32, #tpu.memory_space<vmem>>, vector<256x128xf32>
    tpu.vector_store %arg4[%c0_7, %c0_8], %12 {strides = array<i32>} : memref<256x128xf32, #tpu.memory_space<vmem>>, vector<256x128xf32>,
    return
  }
  func.func @transform_0(%arg0: i32) -> (i32, i32) {
    %c0_i32 = arith.constant 0 : i32
    %c0_i32_0 = arith.constant 0 : i32
    return %arg0, %c0_i32 : i32, i32
  }
  func.func @transform_1(%arg0: i32) -> (i32, i32) {
    %c0_i32 = arith.constant 0 : i32
    %c0_i32_0 = arith.constant 0 : i32
    %c0_i32_1 = arith.constant 0 : i32
    return %c0_i32, %c0_i32_0 : i32, i32
  }
  func.func @transform_2(%arg0: i32) -> (i32, i32) {
    %c0_i32 = arith.constant 0 : i32
    %c0_i32_0 = arith.constant 0 : i32
    %c0_i32_1 = arith.constant 0 : i32
    return %c0_i32, %c0_i32_0 : i32, i32
  }
  func.func @transform_3(%arg0: i32) -> (i32, i32) {
    %c0_i32 = arith.constant 0 : i32
    %c0_i32_0 = arith.constant 0 : i32
    return %arg0, %c0_i32 : i32, i32
  }
}

</mosaic_0001>

<llo_original>
// kernel: tpu_custom_call.1
$region0: #{tpu_custom_call.1}
  #allocation0 [shape = 'u32[]', space=smem, size = 0x4, offset = 0x4, fixed_abs, tag = 'smem constant byte address 0x4 - core index']
  #allocation1 [shape = 'u32[144,128]{1,0:T(1,128)}', space=vmem, size = 0x12000, scoped, tag = 'internal scratch']
  %s0 = inlined_call_operand.vmem [shape: bf16[512,4], index: 0, kind: input, shape index: {}]
  %s1 = inlined_call_operand.vmem [shape: bf16[4,128], index: 1, kind: input, shape index: {}]
  %s2 = inlined_call_operand.vmem [shape: f32[1,128], index: 2, kind: input, shape index: {}]
  %s3 = inlined_call_operand.hbm [shape: f32[512,128], index: 3, kind: output, shape index: {}]
  %s4 = sld [smem:[#allocation0]]
  $region45: #{tpu_custom_call.1} parent=0
    _
  %s6 = ssub.s32 1, %s4
  %s7 = scalar_select 0, %s6, %s4
  $region1: #{tpu_custom_call.1} parent=0
    #allocation2 [shape = 'u8[262144]{0}', space=vmem, size = 0x40000, scoped, tag = 'output window, operand 0']
    #allocation3 [shape = 's32[2]{0}', space=sflag, size = 0x8, scoped, tag = 'scoped memory for tpu_custom_call.1']
    %8 = vsyncpa [#allocation3], 0
    %s9 = scalar_lea.sflag [#allocation3], 1
    %10 = vsyncpa %s9, 0
    loop: start=0, step=1, limit=4
    $region2: #{tpu_custom_call.1} parent=1 // loop_pre_header
      _
    $region3: #{tpu_custom_call.1} parent=1 // loop_header
      %s12 = sphi 0, %s16
      %p13 = scmp.ge.s32.totalorder %s12, 4
      %s22 = sphi 0, %s24
      %s25 = sphi 0, %s22
      %s26 = sphi 0, %s25
      %s42 = sphi 0, %s26
      %s46 = sphi 0, %s46
      %s48 = sphi 0, %s46
      %s49 = sphi 0, %s48
      %s63 = sphi 0, %s49
      %s67 = sphi 0, %s67
      %s69 = sphi 0, %s67
      %s70 = sphi 0, %s69
      %s84 = sphi 0, %s70
      %s90 = sphi 0, %s92
      %s93 = sphi 0, %s90
      %s94 = sphi 0, %s93
      %s110 = sphi 0, %s94
    $region4: #{tpu_custom_call.1} parent=1 // loop_header_branch
      %15 = sbr.rel (%p13) target = $region8
    $region5: #{tpu_custom_call.1} parent=1 // loop_body
      %s17 = ssub.s32 %s12, 1
      %s18 = ssub.s32 %s12, 2
      %s19 = sadd.s32 %s12, 1
      %s20 = ssub.s32 %s12, %s19
      %p21 = scmp.eq.s32.totalorder %s20, 0
      %s23 = sadd.s32 %s22, 1
      %s24 = scalar_select %p21, %s22, %s23
      %p27 = pneg %p21
      %p28 = scmp.eq.s32.totalorder %s12, 1
      %p29 = por %p27, %p28
      %p30 = scmp.ne.s32.totalorder %s22, %s25
      %p31 = scmp.eq.s32.totalorder %s12, 0
      %p32 = por %p30, %p31
      %p33 = scmp.ne.s32.totalorder %s22, %s25
      %p34 = scmp.eq.s32.totalorder %s17, 1
      %p35 = por %p33, %p34
      %p36 = scmp.ne.s32.totalorder %s25, %s26
      %p37 = scmp.eq.s32.totalorder %s17, 0
      %p38 = por %p36, %p37
      %p39 = scmp.ne.s32.totalorder %s25, %s26
      %p40 = scmp.eq.s32.totalorder %s18, 1
      %p41 = por %p39, %p40
      %p43 = scmp.ne.s32.totalorder %s26, %s42
      %p44 = scmp.eq.s32.totalorder %s18, 0
      %p45 = por %p43, %p44
      %s47 = sadd.s32 %s46, 1
      %p50 = scmp.eq.s32.totalorder %s12, 1
      %p51 = scmp.ne.s32.totalorder %s46, %s48
      %p52 = scmp.eq.s32.totalorder %s12, 0
      %p53 = por %p51, %p52
      %p54 = scmp.ne.s32.totalorder %s46, %s48
      %p55 = scmp.eq.s32.totalorder %s17, 1
      %p56 = por %p54, %p55
      %p57 = scmp.ne.s32.totalorder %s48, %s49
      %p58 = scmp.eq.s32.totalorder %s17, 0
      %p59 = por %p57, %p58
      %p60 = scmp.ne.s32.totalorder %s48, %s49
      %p61 = scmp.eq.s32.totalorder %s18, 1
      %p62 = por %p60, %p61
      %p64 = scmp.ne.s32.totalorder %s49, %s63
      %p65 = scmp.eq.s32.totalorder %s18, 0
      %p66 = por %p64, %p65
      %s68 = sadd.s32 %s67, 1
      %p71 = scmp.eq.s32.totalorder %s12, 1
      %p72 = scmp.ne.s32.totalorder %s67, %s69
      %p73 = scmp.eq.s32.totalorder %s12, 0
      %p74 = por %p72, %p73
      %p75 = scmp.ne.s32.totalorder %s67, %s69
      %p76 = scmp.eq.s32.totalorder %s17, 1
      %p77 = por %p75, %p76
      %p78 = scmp.ne.s32.totalorder %s69, %s70
      %p79 = scmp.eq.s32.totalorder %s17, 0
      %p80 = por %p78, %p79
      %p81 = scmp.ne.s32.totalorder %s69, %s70
      %p82 = scmp.eq.s32.totalorder %s18, 1
      %p83 = por %p81, %p82
      %p85 = scmp.ne.s32.totalorder %s70, %s84
      %p86 = scmp.eq.s32.totalorder %s18, 0
      %p87 = por %p85, %p86
      %s88 = ssub.s32 %s12, %s19
      %p89 = scmp.eq.s32.totalorder %s88, 0
      %s91 = sadd.s32 %s90, 1
      %s92 = scalar_select %p89, %s90, %s91
      %p95 = pneg %p89
      %p96 = scmp.eq.s32.totalorder %s12, 1
      %p97 = por %p95, %p96
      %p98 = scmp.ne.s32.totalorder %s90, %s93
      %p99 = scmp.eq.s32.totalorder %s12, 0
      %p100 = por %p98, %p99
      %p101 = scmp.ne.s32.totalorder %s90, %s93
      %p102 = scmp.eq.s32.totalorder %s17, 1
      %p103 = por %p101, %p102
      %p104 = scmp.ne.s32.totalorder %s93, %s94
      %p105 = scmp.eq.s32.totalorder %s17, 0
      %p106 = por %p104, %p105
      %p107 = scmp.ne.s32.totalorder %s93, %s94
      %p108 = scmp.eq.s32.totalorder %s18, 1
      %p109 = por %p107, %p108
      %p111 = scmp.ne.s32.totalorder %s94, %s110
      %p112 = scmp.eq.s32.totalorder %s18, 0
      %p113 = por %p111, %p112
      %p114 = scmp.le.s32.totalorder 1, %s12
      %p115 = scmp.lt.s32.totalorder %s12, 3
      %p116 = pnand %p114, %p115
      %p117 = pneg %p116
      // Predicated region
      $region9: #{tpu_custom_call.1} parent=5 // pred_check
        _
      $region10: #{tpu_custom_call.1} parent=5 // pred_check_branch
        %119 = sbr.rel (%p116) target = $region12
      $region11: #{tpu_custom_call.1} parent=5 // pred_region
        %s120 = ssub.s32 %s12, 1
        // Predicated region
        $region13: #{tpu_custom_call.1} parent=11 // pred_check
          %p121 = pneg %p59
        $region14: #{tpu_custom_call.1} parent=11 // pred_check_branch
          %123 = sbr.rel (%p121) target = $region16
        $region15: #{tpu_custom_call.1} parent=11 // pred_region
          _
        $region16: #{tpu_custom_call.1} parent=11 // pred_fallthru
          _
        // Predicated region
        $region17: #{tpu_custom_call.1} parent=11 // pred_check
          %p124 = pneg %p80
        $region18: #{tpu_custom_call.1} parent=11 // pred_check_branch
          %126 = sbr.rel (%p124) target = $region20
        $region19: #{tpu_custom_call.1} parent=11 // pred_region
          _
        $region20: #{tpu_custom_call.1} parent=11 // pred_fallthru
          _
      $region12: #{tpu_custom_call.1} parent=5 // pred_fallthru
        _
      %p127 = scmp.lt.s32.totalorder %s12, 2
      // Predicated region
      $region21: #{tpu_custom_call.1} parent=5 // pred_check
        %p128 = pneg %p127
      $region22: #{tpu_custom_call.1} parent=5 // pred_check_branch
        %130 = sbr.rel (%p128) target = $region24
      $region23: #{tpu_custom_call.1} parent=5 // pred_region
        // Predicated region
        $region25: #{tpu_custom_call.1} parent=23 // pred_check
          %p131 = pneg %p32
        $region26: #{tpu_custom_call.1} parent=23 // pred_check_branch
          %133 = sbr.rel (%p131) target = $region28
        $region27: #{tpu_custom_call.1} parent=23 // pred_region
          %s134 = smul.u32 32, %s12
          %p135 = scmp.lt.s32.totalorder %s134, 63
          %s136 = scalar_select %p135, %s134, 63
          %s137 = smul.addr %s136, 4
          %s138 = scalar_lea.vmem %s0, %s137
          %s139 = smul.u32 32, %s12
        $region28: #{tpu_custom_call.1} parent=23 // pred_fallthru
          _
      $region24: #{tpu_custom_call.1} parent=5 // pred_fallthru
        _
      %p140 = scmp.le.s32.totalorder 1, %s12
      %p141 = scmp.lt.s32.totalorder %s12, 3
      %p142 = pnand %p140, %p141
      %p143 = pneg %p142
      // Predicated region
      $region29: #{tpu_custom_call.1} parent=5 // pred_check
        _
      $region30: #{tpu_custom_call.1} parent=5 // pred_check_branch
        %145 = sbr.rel (%p142) target = $region32
      $region31: #{tpu_custom_call.1} parent=5 // pred_region
        %s146 = ssub.s32 %s12, 1
        %s147 = smul.u32 32, %s17
        %p148 = scmp.lt.s32.totalorder %s147, 63
        %s149 = scalar_select %p148, %s147, 63
        %s150 = smul.addr %s149, 4
        %s151 = scalar_lea.vmem %s0, %s150
        %p152 = pneg %p38
        %p153 = pneg %p35
        %p154 = pneg %p59
        %p155 = pneg %p56
        %p156 = pneg %p80
        %p157 = pneg %p77
        %p158 = pneg %p106
        %p159 = pneg %p103
        %s160 = sand.u32 %s93, 1
        %s161 = scalar_lea.sflag [#allocation3], %s160
        %s162 = sand.u32 %s93, 1
        %s163 = smul.addr %s162, 256
        %s164 = scalar_lea.vmem [#allocation2], %s163
        %s165 = smul.u32 32, %s17
        %p166 = scmp.lt.s32.totalorder %s165, 63
        %s167 = scalar_select %p166, %s165, 63
        %s168 = smul.addr %s167, 4
        %s169 = scalar_lea.vmem %s0, %s168
        %s170 = smul.u32 32, %s17
        %s171 = smul.u32 32, %s17
        %v173 = vld [vmem:[%s169] sm:$0xf]
        %v174 = vld [vmem:[%s169 + $0x4] sm:$0xf]
        %v175 = vld [vmem:[%s169 + $0x8] sm:$0xf]
        %v176 = vld [vmem:[%s169 + $0xc] sm:$0xf]
        %v177 = vld [vmem:[%s169 + $0x10] sm:$0xf]
        %v178 = vld [vmem:[%s169 + $0x14] sm:$0xf]
        %v179 = vld [vmem:[%s169 + $0x18] sm:$0xf]
        %v180 = vld [vmem:[%s169 + $0x1c] sm:$0xf]
        %v181 = vld [vmem:[%s169 + $0x20] sm:$0xf]
        %v182 = vld [vmem:[%s169 + $0x24] sm:$0xf]
        %v183 = vld [vmem:[%s169 + $0x28] sm:$0xf]
        %v184 = vld [vmem:[%s169 + $0x2c] sm:$0xf]
        %v185 = vld [vmem:[%s169 + $0x30] sm:$0xf]
        %v186 = vld [vmem:[%s169 + $0x34] sm:$0xf]
        %v187 = vld [vmem:[%s169 + $0x38] sm:$0xf]
        %v188 = vld [vmem:[%s169 + $0x3c] sm:$0xf]
        %v189 = vld [vmem:[%s169 + $0x40] sm:$0xf]
        %v190 = vld [vmem:[%s169 + $0x44] sm:$0xf]
        %v191 = vld [vmem:[%s169 + $0x48] sm:$0xf]
        %v192 = vld [vmem:[%s169 + $0x4c] sm:$0xf]
        %v193 = vld [vmem:[%s169 + $0x50] sm:$0xf]
        %v194 = vld [vmem:[%s169 + $0x54] sm:$0xf]
        %v195 = vld [vmem:[%s169 + $0x58] sm:$0xf]
        %v196 = vld [vmem:[%s169 + $0x5c] sm:$0xf]
        %v197 = vld [vmem:[%s169 + $0x60] sm:$0xf]
        %v198 = vld [vmem:[%s169 + $0x64] sm:$0xf]
        %v199 = vld [vmem:[%s169 + $0x68] sm:$0xf]
        %v200 = vld [vmem:[%s169 + $0x6c] sm:$0xf]
        %v201 = vld [vmem:[%s169 + $0x70] sm:$0xf]
        %v202 = vld [vmem:[%s169 + $0x74] sm:$0xf]
        %v203 = vld [vmem:[%s169 + $0x78] sm:$0xf]
        %v204 = vld [vmem:[%s169 + $0x7c] sm:$0xf]
        %v205 = vld [vmem:[%s1] sm:$0x3]
        %v206 = vld [vmem:[%s2] sm:$0x1]
        %v208 = vlaneseq
        %v209 = vshrl.u32 %v208, 7
        %v210 = vsub.s32 0, %v209
        %v211 = vrot.slane %v206, %v210
        %v245 = vunpack.c.l.b16 %v173
        %v246 = vunpack.c.l.b16 %v174
        %v247 = vunpack.c.l.b16 %v175
        %v248 = vunpack.c.l.b16 %v176
        %v249 = vunpack.c.l.b16 %v177
        %v250 = vunpack.c.l.b16 %v178
        %v251 = vunpack.c.l.b16 %v179
        %v252 = vunpack.c.l.b16 %v180
        %v253 = vunpack.c.l.b16 %v181
        %v254 = vunpack.c.l.b16 %v182
        %v255 = vunpack.c.l.b16 %v183
        %v256 = vunpack.c.l.b16 %v184
        %v257 = vunpack.c.l.b16 %v185
        %v258 = vunpack.c.l.b16 %v186
        %v259 = vunpack.c.l.b16 %v187
        %v260 = vunpack.c.l.b16 %v188
        %v261 = vunpack.c.l.b16 %v189
        %v262 = vunpack.c.l.b16 %v190
        %v263 = vunpack.c.l.b16 %v191
        %v264 = vunpack.c.l.b16 %v192
        %v265 = vunpack.c.l.b16 %v193
        %v266 = vunpack.c.l.b16 %v194
        %v267 = vunpack.c.l.b16 %v195
        %v268 = vunpack.c.l.b16 %v196
        %v269 = vunpack.c.l.b16 %v197
        %v270 = vunpack.c.l.b16 %v198
        %v271 = vunpack.c.l.b16 %v199
        %v272 = vunpack.c.l.b16 %v200
        %v273 = vunpack.c.l.b16 %v201
        %v274 = vunpack.c.l.b16 %v202
        %v275 = vunpack.c.l.b16 %v203
        %v276 = vunpack.c.l.b16 %v204
        %v277 = vpack.c.b16 %v246, %v245
        %v278 = vpack.c.b16 %v248, %v247
        %v279 = vpack.c.b16 %v250, %v249
        %v280 = vpack.c.b16 %v252, %v251
        %v281 = vpack.c.b16 %v254, %v253
        %v282 = vpack.c.b16 %v256, %v255
        %v283 = vpack.c.b16 %v258, %v257
        %v284 = vpack.c.b16 %v260, %v259
        %v285 = vpack.c.b16 %v262, %v261
        %v286 = vpack.c.b16 %v264, %v263
        %v287 = vpack.c.b16 %v266, %v265
        %v288 = vpack.c.b16 %v268, %v267
        %v289 = vpack.c.b16 %v270, %v269
        %v290 = vpack.c.b16 %v272, %v271
        %v291 = vpack.c.b16 %v274, %v273
        %v292 = vpack.c.b16 %v276, %v275
        %vm293 = vcmask 31744
        %v295 = vsel %vm293, %v277, 0
        %v298 = vsel %vm293, %v278, 0
        %v301 = vsel %vm293, %v279, 0
        %v304 = vsel %vm293, %v280, 0
        %v307 = vsel %vm293, %v281, 0
        %v310 = vsel %vm293, %v282, 0
        %v313 = vsel %vm293, %v283, 0
        %v316 = vsel %vm293, %v284, 0
        %v319 = vsel %vm293, %v285, 0
        %v322 = vsel %vm293, %v286, 0
        %v325 = vsel %vm293, %v287, 0
        %v328 = vsel %vm293, %v288, 0
        %v331 = vsel %vm293, %v289, 0
        %v334 = vsel %vm293, %v290, 0
        %v337 = vsel %vm293, %v291, 0
        %v340 = vsel %vm293, %v292, 0
        %vm342 = vcmask 1041408
        %v344 = vsel %vm342, %v205, 0
        %346 = vmatprep.subr.bf16.mxu0 0
        %347 = vmatpush1.bf16.msra.mxu0 %v344
        %348 = vmatprep.subr.bf16.mxu0 0
        %349 = vmatpush1.bf16.msra.mxu0 0
        %350 = vmatprep.subr.bf16.mxu0 0
        %351 = vmatpush1.bf16.msra.mxu0 0
        %352 = vmatprep.subr.bf16.mxu0 0
        %353 = vmatpush1.bf16.msra.mxu0 0
        %354 = vmatprep.subr.bf16.mxu0 0
        %355 = vmatpush1.bf16.msra.mxu0 0
        %356 = vmatprep.subr.bf16.mxu0 0
        %357 = vmatpush1.bf16.msra.mxu0 0
        %358 = vmatprep.subr.bf16.mxu0 0
        %359 = vmatpush1.bf16.msra.mxu0 0
        %360 = vmatprep.subr.bf16.mxu0 0
        %361 = vmatpush1.bf16.msra.mxu0 0
        %362 = vmatprep.subr.bf16.mxu0 0
        %363 = vmatpush1.bf16.msra.mxu0 0
        %364 = vmatprep.subr.bf16.mxu0 0
        %365 = vmatpush1.bf16.msra.mxu0 0
        %366 = vmatprep.subr.bf16.mxu0 0
        %367 = vmatpush1.bf16.msra.mxu0 0
        %368 = vmatprep.subr.bf16.mxu0 0
        %369 = vmatpush1.bf16.msra.mxu0 0
        %370 = vmatprep.subr.bf16.mxu0 0
        %371 = vmatpush1.bf16.msra.mxu0 0
        %372 = vmatprep.subr.bf16.mxu0 0
        %373 = vmatpush1.bf16.msra.mxu0 0
        %374 = vmatprep.subr.bf16.mxu0 0
        %375 = vmatpush1.bf16.msra.mxu0 0
        %376 = vmatprep.subr.bf16.mxu0 0
        %377 = vmatpush1.bf16.msra.mxu0 0
        %378 = vmatprep.mubr.bf16.mxu0 0
        %379 = vmatmul.mubr.bf16.gmra.mrb[0].mxu0 %v295
        %v380 = vpop.f32.mrb[0].mxu0
        %v381 = vadd.f32 %v211, %v380
        %v382 = vpop.f32.mrb[0].mxu0
        %v383 = vpop.f32.mrb[0].mxu0
        %v384 = vadd.f32 %v211, %v383
        %v385 = vpop.f32.mrb[0].mxu0
        %386 = vmatprep.mubr.bf16.mxu0 0
        %387 = vmatmul.mubr.bf16.gmra.mrb[0].mxu0 %v298
        %v388 = vpop.f32.mrb[0].mxu0
        %v389 = vadd.f32 %v211, %v388
        %v390 = vpop.f32.mrb[0].mxu0
        %v391 = vpop.f32.mrb[0].mxu0
        %v392 = vadd.f32 %v211, %v391
        %v393 = vpop.f32.mrb[0].mxu0
        %394 = vmatprep.mubr.bf16.mxu0 0
        %395 = vmatmul.mubr.bf16.gmra.mrb[0].mxu0 %v301
        %v396 = vpop.f32.mrb[0].mxu0
        %v397 = vadd.f32 %v211, %v396
        %v398 = vpop.f32.mrb[0].mxu0
        %v399 = vpop.f32.mrb[0].mxu0
        %v400 = vadd.f32 %v211, %v399
        %v401 = vpop.f32.mrb[0].mxu0
        %402 = vmatprep.mubr.bf16.mxu0 0
        %403 = vmatmul.mubr.bf16.gmra.mrb[0].mxu0 %v304
        %v404 = vpop.f32.mrb[0].mxu0
        %v405 = vadd.f32 %v211, %v404
        %v406 = vpop.f32.mrb[0].mxu0
        %v407 = vpop.f32.mrb[0].mxu0
        %v408 = vadd.f32 %v211, %v407
        %v409 = vpop.f32.mrb[0].mxu0
        %410 = vmatprep.mubr.bf16.mxu0 0
        %411 = vmatmul.mubr.bf16.gmra.mrb[0].mxu0 %v307
        %v412 = vpop.f32.mrb[0].mxu0
        %v413 = vadd.f32 %v211, %v412
        %v414 = vpop.f32.mrb[0].mxu0
        %v415 = vpop.f32.mrb[0].mxu0
        %v416 = vadd.f32 %v211, %v415
        %v417 = vpop.f32.mrb[0].mxu0
        %418 = vmatprep.mubr.bf16.mxu0 0
        %419 = vmatmul.mubr.bf16.gmra.mrb[0].mxu0 %v310
        %v420 = vpop.f32.mrb[0].mxu0
        %v421 = vadd.f32 %v211, %v420
        %v422 = vpop.f32.mrb[0].mxu0
        %v423 = vpop.f32.mrb[0].mxu0
        %v424 = vadd.f32 %v211, %v423
        %v425 = vpop.f32.mrb[0].mxu0
        %426 = vmatprep.mubr.bf16.mxu0 0
        %427 = vmatmul.mubr.bf16.gmra.mrb[0].mxu0 %v313
        %v428 = vpop.f32.mrb[0].mxu0
        %v429 = vadd.f32 %v211, %v428
        %v430 = vpop.f32.mrb[0].mxu0
        %v431 = vpop.f32.mrb[0].mxu0
        %v432 = vadd.f32 %v211, %v431
        %v433 = vpop.f32.mrb[0].mxu0
        %434 = vmatprep.mubr.bf16.mxu0 0
        %435 = vmatmul.mubr.bf16.gmra.mrb[0].mxu0 %v316
        %v436 = vpop.f32.mrb[0].mxu0
        %v437 = vadd.f32 %v211, %v436
        %v438 = vpop.f32.mrb[0].mxu0
        %v439 = vpop.f32.mrb[0].mxu0
        %v440 = vadd.f32 %v211, %v439
        %v441 = vpop.f32.mrb[0].mxu0
        %442 = vmatprep.mubr.bf16.mxu0 0
        %443 = vmatmul.mubr.bf16.gmra.mrb[0].mxu0 %v319
        %v444 = vpop.f32.mrb[0].mxu0
        %v445 = vadd.f32 %v211, %v444
        %v446 = vpop.f32.mrb[0].mxu0
        %v447 = vpop.f32.mrb[0].mxu0
        %v448 = vadd.f32 %v211, %v447
        %v449 = vpop.f32.mrb[0].mxu0
        %450 = vmatprep.mubr.bf16.mxu0 0
        %451 = vmatmul.mubr.bf16.gmra.mrb[0].mxu0 %v322
        %v452 = vpop.f32.mrb[0].mxu0
        %v453 = vadd.f32 %v211, %v452
        %v454 = vpop.f32.mrb[0].mxu0
        %v455 = vpop.f32.mrb[0].mxu0
        %v456 = vadd.f32 %v211, %v455
        %v457 = vpop.f32.mrb[0].mxu0
        %458 = vmatprep.mubr.bf16.mxu0 0
        %459 = vmatmul.mubr.bf16.gmra.mrb[0].mxu0 %v325
        %v460 = vpop.f32.mrb[0].mxu0
        %v461 = vadd.f32 %v211, %v460
        %v462 = vpop.f32.mrb[0].mxu0
        %v463 = vpop.f32.mrb[0].mxu0
        %v464 = vadd.f32 %v211, %v463
        %v465 = vpop.f32.mrb[0].mxu0
        %466 = vmatprep.mubr.bf16.mxu0 0
        %467 = vmatmul.mubr.bf16.gmra.mrb[0].mxu0 %v328
        %v468 = vpop.f32.mrb[0].mxu0
        %v469 = vadd.f32 %v211, %v468
        %v470 = vpop.f32.mrb[0].mxu0
        %v471 = vpop.f32.mrb[0].mxu0
        %v472 = vadd.f32 %v211, %v471
        %v473 = vpop.f32.mrb[0].mxu0
        %474 = vmatprep.mubr.bf16.mxu0 0
        %475 = vmatmul.mubr.bf16.gmra.mrb[0].mxu0 %v331
        %v476 = vpop.f32.mrb[0].mxu0
        %v477 = vadd.f32 %v211, %v476
        %v478 = vpop.f32.mrb[0].mxu0
        %v479 = vpop.f32.mrb[0].mxu0
        %v480 = vadd.f32 %v211, %v479
        %v481 = vpop.f32.mrb[0].mxu0
        %482 = vmatprep.mubr.bf16.mxu0 0
        %483 = vmatmul.mubr.bf16.gmra.mrb[0].mxu0 %v334
        %v484 = vpop.f32.mrb[0].mxu0
        %v485 = vadd.f32 %v211, %v484
        %v486 = vpop.f32.mrb[0].mxu0
        %v487 = vpop.f32.mrb[0].mxu0
        %v488 = vadd.f32 %v211, %v487
        %v489 = vpop.f32.mrb[0].mxu0
        %490 = vmatprep.mubr.bf16.mxu0 0
        %491 = vmatmul.mubr.bf16.gmra.mrb[0].mxu0 %v337
        %v492 = vpop.f32.mrb[0].mxu0
        %v493 = vadd.f32 %v211, %v492
        %v494 = vpop.f32.mrb[0].mxu0
        %v495 = vpop.f32.mrb[0].mxu0
        %v496 = vadd.f32 %v211, %v495
        %v497 = vpop.f32.mrb[0].mxu0
        %498 = vmatprep.mubr.bf16.mxu0 0
        %499 = vmatmul.mubr.bf16.gmra.mrb[0].mxu0 %v340
        %v500 = vpop.f32.mrb[0].mxu0
        %v501 = vadd.f32 %v211, %v500
        %v502 = vpop.f32.mrb[0].mxu0
        %v503 = vpop.f32.mrb[0].mxu0
        %v504 = vadd.f32 %v211, %v503
        %v505 = vpop.f32.mrb[0].mxu0
        %506 = vdwg.mxu0
        %v507 = vsub.f32 0.0, %v381
        %v508 = vsub.f32 0.0, %v384
        %v509 = vsub.f32 0.0, %v389
        %v510 = vsub.f32 0.0, %v392
        %v511 = vsub.f32 0.0, %v397
        %v512 = vsub.f32 0.0, %v400
        %v513 = vsub.f32 0.0, %v405
        %v514 = vsub.f32 0.0, %v408
        %v515 = vsub.f32 0.0, %v413
        %v516 = vsub.f32 0.0, %v416
        %v517 = vsub.f32 0.0, %v421
        %v518 = vsub.f32 0.0, %v424
        %v519 = vsub.f32 0.0, %v429
        %v520 = vsub.f32 0.0, %v432
        %v521 = vsub.f32 0.0, %v437
        %v522 = vsub.f32 0.0, %v440
        %v523 = vsub.f32 0.0, %v445
        %v524 = vsub.f32 0.0, %v448
        %v525 = vsub.f32 0.0, %v453
        %v526 = vsub.f32 0.0, %v456
        %v527 = vsub.f32 0.0, %v461
        %v528 = vsub.f32 0.0, %v464
        %v529 = vsub.f32 0.0, %v469
        %v530 = vsub.f32 0.0, %v472
        %v531 = vsub.f32 0.0, %v477
        %v532 = vsub.f32 0.0, %v480
        %v533 = vsub.f32 0.0, %v485
        %v534 = vsub.f32 0.0, %v488
        %v535 = vsub.f32 0.0, %v493
        %v536 = vsub.f32 0.0, %v496
        %v537 = vsub.f32 0.0, %v501
        %v538 = vsub.f32 0.0, %v504
        %v539 = vmul.f32 %v507, 1.442695
        %v540 = vpow.pop %v539
        %v541 = vmul.f32 %v508, 1.442695
        %v542 = vpow.pop %v541
        %v543 = vmul.f32 %v509, 1.442695
        %v544 = vpow.pop %v543
        %v545 = vmul.f32 %v510, 1.442695
        %v546 = vpow.pop %v545
        %v547 = vmul.f32 %v511, 1.442695
        %v548 = vpow.pop %v547
        %v549 = vmul.f32 %v512, 1.442695
        %v550 = vpow.pop %v549
        %v551 = vmul.f32 %v513, 1.442695
        %v552 = vpow.pop %v551
        %v553 = vmul.f32 %v514, 1.442695
        %v554 = vpow.pop %v553
        %v555 = vmul.f32 %v515, 1.442695
        %v556 = vpow.pop %v555
        %v557 = vmul.f32 %v516, 1.442695
        %v558 = vpow.pop %v557
        %v559 = vmul.f32 %v517, 1.442695
        %v560 = vpow.pop %v559
        %v561 = vmul.f32 %v518, 1.442695
        %v562 = vpow.pop %v561
        %v563 = vmul.f32 %v519, 1.442695
        %v564 = vpow.pop %v563
        %v565 = vmul.f32 %v520, 1.442695
        %v566 = vpow.pop %v565
        %v567 = vmul.f32 %v521, 1.442695
        %v568 = vpow.pop %v567
        %v569 = vmul.f32 %v522, 1.442695
        %v570 = vpow.pop %v569
        %v571 = vmul.f32 %v523, 1.442695
        %v572 = vpow.pop %v571
        %v573 = vmul.f32 %v524, 1.442695
        %v574 = vpow.pop %v573
        %v575 = vmul.f32 %v525, 1.442695
        %v576 = vpow.pop %v575
        %v577 = vmul.f32 %v526, 1.442695
        %v578 = vpow.pop %v577
        %v579 = vmul.f32 %v527, 1.442695
        %v580 = vpow.pop %v579
        %v581 = vmul.f32 %v528, 1.442695
        %v582 = vpow.pop %v581
        %v583 = vmul.f32 %v529, 1.442695
        %v584 = vpow.pop %v583
        %v585 = vmul.f32 %v530, 1.442695
        %v586 = vpow.pop %v585
        %v587 = vmul.f32 %v531, 1.442695
        %v588 = vpow.pop %v587
        %v589 = vmul.f32 %v532, 1.442695
        %v590 = vpow.pop %v589
        %v591 = vmul.f32 %v533, 1.442695
        %v592 = vpow.pop %v591
        %v593 = vmul.f32 %v534, 1.442695
        %v594 = vpow.pop %v593
        %v595 = vmul.f32 %v535, 1.442695
        %v596 = vpow.pop %v595
        %v597 = vmul.f32 %v536, 1.442695
        %v598 = vpow.pop %v597
        %v599 = vmul.f32 %v537, 1.442695
        %v600 = vpow.pop %v599
        %v601 = vmul.f32 %v538, 1.442695
        %v602 = vpow.pop %v601
        %v603 = vadd.f32 %v540, 1.0
        %v604 = vadd.f32 %v542, 1.0
        %v605 = vadd.f32 %v544, 1.0
        %v606 = vadd.f32 %v546, 1.0
        %v607 = vadd.f32 %v548, 1.0
        %v608 = vadd.f32 %v550, 1.0
        %v609 = vadd.f32 %v552, 1.0
        %v610 = vadd.f32 %v554, 1.0
        %v611 = vadd.f32 %v556, 1.0
        %v612 = vadd.f32 %v558, 1.0
        %v613 = vadd.f32 %v560, 1.0
        %v614 = vadd.f32 %v562, 1.0
        %v615 = vadd.f32 %v564, 1.0
        %v616 = vadd.f32 %v566, 1.0
        %v617 = vadd.f32 %v568, 1.0
        %v618 = vadd.f32 %v570, 1.0
        %v619 = vadd.f32 %v572, 1.0
        %v620 = vadd.f32 %v574, 1.0
        %v621 = vadd.f32 %v576, 1.0
        %v622 = vadd.f32 %v578, 1.0
        %v623 = vadd.f32 %v580, 1.0
        %v624 = vadd.f32 %v582, 1.0
        %v625 = vadd.f32 %v584, 1.0
        %v626 = vadd.f32 %v586, 1.0
        %v627 = vadd.f32 %v588, 1.0
        %v628 = vadd.f32 %v590, 1.0
        %v629 = vadd.f32 %v592, 1.0
        %v630 = vadd.f32 %v594, 1.0
        %v631 = vadd.f32 %v596, 1.0
        %v632 = vadd.f32 %v598, 1.0
        %v633 = vadd.f32 %v600, 1.0
        %v634 = vadd.f32 %v602, 1.0
        %v635 = vrcp.pop %v603
        %v636 = vrcp.pop %v604
        %v637 = vrcp.pop %v605
        %v638 = vrcp.pop %v606
        %v639 = vrcp.pop %v607
        %v640 = vrcp.pop %v608
        %v641 = vrcp.pop %v609
        %v642 = vrcp.pop %v610
        %v643 = vrcp.pop %v611
        %v644 = vrcp.pop %v612
        %v645 = vrcp.pop %v613
        %v646 = vrcp.pop %v614
        %v647 = vrcp.pop %v615
        %v648 = vrcp.pop %v616
        %v649 = vrcp.pop %v617
        %v650 = vrcp.pop %v618
        %v651 = vrcp.pop %v619
        %v652 = vrcp.pop %v620
        %v653 = vrcp.pop %v621
        %v654 = vrcp.pop %v622
        %v655 = vrcp.pop %v623
        %v656 = vrcp.pop %v624
        %v657 = vrcp.pop %v625
        %v658 = vrcp.pop %v626
        %v659 = vrcp.pop %v627
        %v660 = vrcp.pop %v628
        %v661 = vrcp.pop %v629
        %v662 = vrcp.pop %v630
        %v663 = vrcp.pop %v631
        %v664 = vrcp.pop %v632
        %v665 = vrcp.pop %v633
        %v666 = vrcp.pop %v634
        %v667 = vmul.f32 %v381, %v635
        %v668 = vmul.f32 %v384, %v636
        %v669 = vmul.f32 %v389, %v637
        %v670 = vmul.f32 %v392, %v638
        %v671 = vmul.f32 %v397, %v639
        %v672 = vmul.f32 %v400, %v640
        %v673 = vmul.f32 %v405, %v641
        %v674 = vmul.f32 %v408, %v642
        %v675 = vmul.f32 %v413, %v643
        %v676 = vmul.f32 %v416, %v644
        %v677 = vmul.f32 %v421, %v645
        %v678 = vmul.f32 %v424, %v646
        %v679 = vmul.f32 %v429, %v647
        %v680 = vmul.f32 %v432, %v648
        %v681 = vmul.f32 %v437, %v649
        %v682 = vmul.f32 %v440, %v650
        %v683 = vmul.f32 %v445, %v651
        %v684 = vmul.f32 %v448, %v652
        %v685 = vmul.f32 %v453, %v653
        %v686 = vmul.f32 %v456, %v654
        %v687 = vmul.f32 %v461, %v655
        %v688 = vmul.f32 %v464, %v656
        %v689 = vmul.f32 %v469, %v657
        %v690 = vmul.f32 %v472, %v658
        %v691 = vmul.f32 %v477, %v659
        %v692 = vmul.f32 %v480, %v660
        %v693 = vmul.f32 %v485, %v661
        %v694 = vmul.f32 %v488, %v662
        %v695 = vmul.f32 %v493, %v663
        %v696 = vmul.f32 %v496, %v664
        %v697 = vmul.f32 %v501, %v665
        %v698 = vmul.f32 %v504, %v666
        %699 = vst [vmem:[%s164] sm:$0xff] %v667
        %700 = vst [vmem:[%s164 + $0x8] sm:$0xff] %v668
        %701 = vst [vmem:[%s164 + $0x10] sm:$0xff] %v669
        %702 = vst [vmem:[%s164 + $0x18] sm:$0xff] %v670
        %703 = vst [vmem:[%s164 + $0x20] sm:$0xff] %v671
        %704 = vst [vmem:[%s164 + $0x28] sm:$0xff] %v672
        %705 = vst [vmem:[%s164 + $0x30] sm:$0xff] %v673
        %706 = vst [vmem:[%s164 + $0x38] sm:$0xff] %v674
        %707 = vst [vmem:[%s164 + $0x40] sm:$0xff] %v675
        %708 = vst [vmem:[%s164 + $0x48] sm:$0xff] %v676
        %709 = vst [vmem:[%s164 + $0x50] sm:$0xff] %v677
        %710 = vst [vmem:[%s164 + $0x58] sm:$0xff] %v678
        %711 = vst [vmem:[%s164 + $0x60] sm:$0xff] %v679
        %712 = vst [vmem:[%s164 + $0x68] sm:$0xff] %v680
        %713 = vst [vmem:[%s164 + $0x70] sm:$0xff] %v681
        %714 = vst [vmem:[%s164 + $0x78] sm:$0xff] %v682
        %715 = vst [vmem:[%s164 + $0x80] sm:$0xff] %v683
        %716 = vst [vmem:[%s164 + $0x88] sm:$0xff] %v684
        %717 = vst [vmem:[%s164 + $0x90] sm:$0xff] %v685
        %718 = vst [vmem:[%s164 + $0x98] sm:$0xff] %v686
        %719 = vst [vmem:[%s164 + $0xa0] sm:$0xff] %v687
        %720 = vst [vmem:[%s164 + $0xa8] sm:$0xff] %v688
        %721 = vst [vmem:[%s164 + $0xb0] sm:$0xff] %v689
        %722 = vst [vmem:[%s164 + $0xb8] sm:$0xff] %v690
        %723 = vst [vmem:[%s164 + $0xc0] sm:$0xff] %v691
        %724 = vst [vmem:[%s164 + $0xc8] sm:$0xff] %v692
        %725 = vst [vmem:[%s164 + $0xd0] sm:$0xff] %v693
        %726 = vst [vmem:[%s164 + $0xd8] sm:$0xff] %v694
        %727 = vst [vmem:[%s164 + $0xe0] sm:$0xff] %v695
        %728 = vst [vmem:[%s164 + $0xe8] sm:$0xff] %v696
        %729 = vst [vmem:[%s164 + $0xf0] sm:$0xff] %v697
        %730 = vst [vmem:[%s164 + $0xf8] sm:$0xff] %v698
        %s731 = sand.u32 %s93, 1
        %s732 = scalar_lea.sflag [#allocation3], %s731
        %s733 = sand.u32 %s93, 1
        %s734 = smul.addr %s733, 256
        %s735 = scalar_lea.vmem [#allocation2], %s734
        // Predicated region
        $region33: #{tpu_custom_call.1} parent=31 // pred_check
          %p736 = pneg %p103
        $region34: #{tpu_custom_call.1} parent=31 // pred_check_branch
          %738 = sbr.rel (%p736) target = $region36
        $region35: #{tpu_custom_call.1} parent=31 // pred_region
          %s739 = smul.u32 32, %s17
          %s741 = ssub.s32 4096, 4096
          %742 = vsyncadd %s732, %s741
          %s743 = smul.addr %s739, 128
          %s744 = scalar_lea.hbm %s3, %s743
          %s745 = sshll.u32 %s735, 4
          %s746 = int_to_ptr.vmem [resolvable:$true] %s745
          %751 = dma.vmem_to_hbm [thread:$0]  %s746, 4096, %s744, %s732, 128, 128, 8
        $region36: #{tpu_custom_call.1} parent=31 // pred_fallthru
          _
      $region32: #{tpu_custom_call.1} parent=5 // pred_fallthru
        _
      %p752 = scmp.le.s32.totalorder 2, %s12
      // Predicated region
      $region37: #{tpu_custom_call.1} parent=5 // pred_check
        %p753 = pneg %p752
      $region38: #{tpu_custom_call.1} parent=5 // pred_check_branch
        %755 = sbr.rel (%p753) target = $region40
      $region39: #{tpu_custom_call.1} parent=5 // pred_region
        %s756 = ssub.s32 %s12, 2
        // Predicated region
        $region41: #{tpu_custom_call.1} parent=39 // pred_check
          %p757 = pneg %p109
        $region42: #{tpu_custom_call.1} parent=39 // pred_check_branch
          %759 = sbr.rel (%p757) target = $region44
        $region43: #{tpu_custom_call.1} parent=39 // pred_region
          %s760 = sand.u32 %s94, 1
          %s761 = scalar_lea.sflag [#allocation3], %s760
          %s762 = sand.u32 %s94, 1
          %s763 = smul.addr %s762, 256
          %s764 = scalar_lea.vmem [#allocation2], %s763
          %765 = dma.done %s761, 4096
        $region44: #{tpu_custom_call.1} parent=39 // pred_fallthru
          _
      $region40: #{tpu_custom_call.1} parent=5 // pred_fallthru
        _
    $region6: #{tpu_custom_call.1} parent=1 // loop_footer
      %s16 = sadd.s32 1, %s12
    $region7: #{tpu_custom_call.1} parent=1 // loop_footer_branch
      %11 = sbr.rel target = $region3
    $region8: #{tpu_custom_call.1} parent=1 // loop_exit
      _
    %766 = vsyncpa [#allocation3], 1
    %s767 = scalar_lea.sflag [#allocation3], 1
    %768 = vsyncpa %s767, 1

</llo_original>
